<compile_context>
chip_gen: v5e
topology: v5e:2x2
jax: 0.10.0
libtpu: 0.0.40
codegen_flags: <defaults>
</compile_context>

<pallas_src>
import functools

import jax
import jax.numpy as jnp
from jax.experimental import pallas as pl
from jax.experimental.pallas import tpu as pltpu


_HAS_BUFFERED = hasattr(pl, "Buffered")
_VMEM_BUDGET = 48 * 2**20          # leave headroom under v7x's 64 MiB VMEM


def _round_up(n, m):
    return (n + m - 1) // m * m


def _sublane_multiple(dtype):
    # native sublane packing: f32 -> 8, bf16/f16 -> 16, int8/fp8 -> 32
    return {4: 8, 2: 16, 1: 32}.get(jnp.dtype(dtype).itemsize, 8)


# --------------------------------------------------------------------------
# Kernel
# --------------------------------------------------------------------------
def _adapter_body(x_ref, res_ref, ln_g_ref, ln_b_ref, wd_ref, bd_ref,
                  wu_ref, bu_ref, o_ref, *, scale, eps, add_residual):
    # ---- LayerNorm ('in') over the true (unpadded) feature width ------------
    x = x_ref[...].astype(jnp.float32)                       # (tm, D)
    mean = jnp.mean(x, axis=-1, keepdims=True)
    xc = x - mean
    var = jnp.mean(xc * xc, axis=-1, keepdims=True)          # two-pass variance
    xn = xc * jax.lax.rsqrt(var + eps)
    xn = xn * ln_g_ref[...] + ln_b_ref[...]                  # (tm, D)

    # ---- down projection + ReLU (bf16 MXU, f32 accumulate) ------------------
    down = jnp.dot(xn.astype(wd_ref.dtype), wd_ref[...],
                   preferred_element_type=jnp.float32)       # (tm, Rp)
    down = jnp.maximum(down + bd_ref[...], 0.0)
    # TODO(synk): dropout is identity here (p=0.0 / eval mode), so it is omitted.

    # ---- up projection + scale (+ residual) ---------------------------------
    up = jnp.dot(down.astype(wu_ref.dtype), wu_ref[...],
                 preferred_element_type=jnp.float32)         # (tm, D)
    up = (up + bu_ref[...]) * scale

    if add_residual:
        up = up + res_ref[...].astype(jnp.float32)
    o_ref[...] = up.astype(o_ref.dtype)


def _kernel_no_res(x_ref, ln_g, ln_b, wd, bd, wu, bu, o_ref, *,
                   scale, eps, add_residual):
    # residual (when requested) is x itself -> reuse the already-DMA'd tile.
    _adapter_body(x_ref, x_ref, ln_g, ln_b, wd, bd, wu, bu, o_ref,
                  scale=scale, eps=eps, add_residual=add_residual)


def _kernel_with_res(x_ref, res_ref, ln_g, ln_b, wd, bd, wu, bu, o_ref, *,
                     scale, eps, add_residual):
    _adapter_body(x_ref, res_ref, ln_g, ln_b, wd, bd, wu, bu, o_ref,
                  scale=scale, eps=eps, add_residual=add_residual)


# --------------------------------------------------------------------------
# One-time parameter preparation (cache the result; do NOT redo per call)
# --------------------------------------------------------------------------
def prepare_adapter_params(params, compute_dtype=jnp.bfloat16):
    """Pad bottleneck dim to a multiple of 128 lanes and cast weights once."""
    D, R = params["w_down"].shape
    Rp = _round_up(R, 128)
    return {
        "ln_gamma": params["ln_gamma"].astype(jnp.float32).reshape(1, D),
        "ln_beta": params["ln_beta"].astype(jnp.float32).reshape(1, D),
        "w_down": jnp.zeros((D, Rp), compute_dtype).at[:, :R].set(
            params["w_down"].astype(compute_dtype)),
        "b_down": jnp.zeros((1, Rp), jnp.float32).at[0, :R].set(
            params["b_down"].astype(jnp.float32)),
        "w_up": jnp.zeros((Rp, D), compute_dtype).at[:R, :].set(
            params["w_up"].astype(compute_dtype)),
        "b_up": params["b_up"].astype(jnp.float32).reshape(1, D),
    }


# --------------------------------------------------------------------------
# VMEM budgeting & tile selection
# --------------------------------------------------------------------------
def _vmem_bytes(tm, D, Rp, io_itemsize, n_row_streams, weight_bytes,
                weight_bufs):
    row_io = 2 * n_row_streams * tm * D * io_itemsize          # dbl-buf I/O tiles
    interm = tm * (12 * D + 4 * Rp)                            # f32: x, xn, up, down
    interm += tm * (2 * D + 2 * Rp)                            # bf16 casts: xn, down
    small = 2 * (3 * D + Rp) * 4                               # gamma/beta/biases
    return row_io + interm + weight_bufs * weight_bytes + small


def _pick_tile_m(M, D, Rp, io_itemsize, n_row_streams, weight_bytes,
                 weight_bufs, tile_m, sublane):
    # >= 2 grid steps so dimension_semantics=('parallel',) can use both v7x TCs.
    tm = min(int(tile_m), _round_up(pl.cdiv(M, 2), sublane))
    tm = max(_round_up(tm, sublane), sublane)
    while (tm > sublane and
           _vmem_bytes(tm, D, Rp, io_itemsize, n_row_streams, weight_bytes,
                       weight_bufs) > _VMEM_BUDGET):
        tm = max(_round_up(tm // 2, sublane), sublane)
    return tm


# --------------------------------------------------------------------------
# Wrapper
# --------------------------------------------------------------------------
def adapter_forward(x, params, *, scale=1.0, eps=1e-5, add_residual=True,
                    residual=None, tile_m=512, prepared=False):
    """x: (B, N, D). Returns (B, N, D). `params` may be raw or prepared."""
    B, N, D = x.shape
    p = params if prepared else prepare_adapter_params(params)
    Rp = p["w_down"].shape[1]
    M = B * N

    x2 = x.reshape(M, D)                      # free view; no padding, no copy

    has_res = (residual is not None) and add_residual
    n_row_streams = 3 if has_res else 2       # x (+ residual) + out
    weight_bytes = 2 * D * Rp * jnp.dtype(p["w_down"].dtype).itemsize
    weight_bufs = 1 if _HAS_BUFFERED else 2
    sublane = _sublane_multiple(x.dtype)
    io_itemsize = jnp.dtype(x.dtype).itemsize

    tm = _pick_tile_m(M, D, Rp, io_itemsize, n_row_streams, weight_bytes,
                      weight_bufs, tile_m, sublane)
    grid = (pl.cdiv(M, tm),)                  # tail handled by edge-block masking

    row_spec = pl.BlockSpec((tm, D), lambda i: (i, 0))

    def const_spec(shape, single_buffer):
        # constant index_map -> DMA'd once; single-buffer to save VMEM when possible
        if single_buffer and _HAS_BUFFERED:
            return pl.BlockSpec(shape, lambda i: (0, 0),
                                pipeline_mode=pl.Buffered(1))
        return pl.BlockSpec(shape, lambda i: (0, 0))

    common = dict(scale=float(scale), eps=float(eps),
                  add_residual=bool(add_residual))
    weights = (p["ln_gamma"], p["ln_beta"], p["w_down"], p["b_down"],
               p["w_up"], p["b_up"])
    weight_shapes = [(1, D), (1, D), (D, Rp), (1, Rp), (Rp, D), (1, D)]

    if has_res:
        kernel = functools.partial(_kernel_with_res, **common)
        operands = (x2, residual.reshape(M, D)) + weights
        row_streams = [row_spec, row_spec]
    else:
        kernel = functools.partial(_kernel_no_res, **common)
        operands = (x2,) + weights
        row_streams = [row_spec]

    vmem_est = _vmem_bytes(tm, D, Rp, io_itemsize, n_row_streams,
                           weight_bytes, weight_bufs)
    vmem_limit = int(min(64 * 2**20, max(32 * 2**20, int(1.25 * vmem_est))))

    def build(single_buffer_weights):
        in_specs = row_streams + [const_spec(s, single_buffer_weights)
                                  for s in weight_shapes]
        return pl.pallas_call(
            kernel,
            out_shape=jax.ShapeDtypeStruct((M, D), x.dtype),
            grid_spec=pl.GridSpec(grid=grid, in_specs=in_specs,
                                  out_specs=row_spec),
            compiler_params=pltpu.CompilerParams(
                dimension_semantics=("parallel",),
                vmem_limit_bytes=vmem_limit,
            ),
        )

    try:
        out = build(True)(*operands)
    except Exception:
        # pl.Buffered(1) not supported on this JAX version -> default buffering.
        out = build(False)(*operands)

    return out.reshape(B, N, D)


# --------------------------------------------------------------------------
# Init & reference (for correctness checks)
# --------------------------------------------------------------------------
def init_adapter_params(key, d_model, bottleneck):
    """Deterministic init matching Adapter.__init__ with init_option='lora'."""
    bound = 1.0 / jnp.sqrt(jnp.float32(d_model))
    w_down_t = jax.random.uniform(key, (bottleneck, d_model),
                                  minval=-bound, maxval=bound,
                                  dtype=jnp.float32)             # torch (out, in)
    return {
        "ln_gamma": jnp.ones((d_model,), jnp.float32),
        "ln_beta": jnp.zeros((d_model,), jnp.float32),
        "w_down": w_down_t.T,                                    # (D, R) for x @ W
        "b_down": jnp.zeros((bottleneck,), jnp.float32),
        "w_up": jnp.zeros((bottleneck, d_model), jnp.float32),   # lora: zeros
        "b_up": jnp.zeros((d_model,), jnp.float32),
    }


def adapter_reference(x, params, scale=1.0, eps=1e-5, add_residual=True,
                      residual=None):
    """Pure-JAX f32 reference."""
    res = x if residual is None else residual
    mean = jnp.mean(x, axis=-1, keepdims=True)
    var = jnp.mean((x - mean) ** 2, axis=-1, keepdims=True)
    xn = (x - mean) / jnp.sqrt(var + eps)
    xn = xn * params["ln_gamma"] + params["ln_beta"]
    down = jnp.maximum(xn @ params["w_down"] + params["b_down"], 0.0)
    up = (down @ params["w_up"] + params["b_up"]) * scale
    return up + res if add_residual else up


if __name__ == "__main__":
    key = jax.random.PRNGKey(0)
    k_x, k_w, k_r, k1, k2, k3, k4, k5, k6 = jax.random.split(key, 9)

    B, N, D, R = 2, 8, 32, 16          # batch, seq, d_model, bottleneck
    x = jax.random.normal(k_x, (B, N, D), dtype=jnp.float32)

    # ---- 1) LoRA-initialized adapter (matches PyTorch init) ----------------
    params = init_adapter_params(k_w, D, R)
    prep = prepare_adapter_params(params)                 # one-time prep, cached
    out = jax.block_until_ready(adapter_forward(x, prep, prepared=True))
    ref = adapter_reference(x, params)
    assert out.shape == (B, N, D)
    assert jnp.allclose(out, ref, atol=1e-4, rtol=1e-4), "mismatch (lora init)"

    # ---- 2) Random weights to exercise the full math path ------------------
    bound = 1.0 / jnp.sqrt(jnp.float32(D))
    params_rnd = {
        "ln_gamma": 1.0 + 0.1 * jax.random.normal(k1, (D,), jnp.float32),
        "ln_beta": 0.1 * jax.random.normal(k2, (D,), jnp.float32),
        "w_down": jax.random.uniform(k3, (D, R), minval=-bound, maxval=bound,
                                     dtype=jnp.float32),
        "b_down": 0.1 * jax.random.normal(k4, (R,), jnp.float32),
        "w_up": 0.1 * jax.random.normal(k5, (R, D), jnp.float32),
        "b_up": 0.1 * jax.random.normal(k6, (D,), jnp.float32),
    }
    prep_rnd = prepare_adapter_params(params_rnd)         # one-time prep, cached
    out2 = jax.block_until_ready(
        adapter_forward(x, prep_rnd, prepared=True, scale=0.5))
    ref2 = adapter_reference(x, params_rnd, scale=0.5)
    assert jnp.allclose(out2, ref2, atol=3e-2, rtol=3e-2), "mismatch (random)"

    # ---- 3) add_residual=False path -----------------------------------------
    out3 = jax.block_until_ready(
        adapter_forward(x, prep_rnd, prepared=True, scale=0.5,
                        add_residual=False))
    ref3 = adapter_reference(x, params_rnd, scale=0.5, add_residual=False)
    assert jnp.allclose(out3, ref3, atol=3e-2, rtol=3e-2), "mismatch (no residual)"

    # ---- 4) explicit residual path ------------------------------------------
    resid = jax.random.normal(k_r, (B, N, D), dtype=jnp.float32)
    out4 = jax.block_until_ready(
        adapter_forward(x, prep_rnd, prepared=True, scale=0.5, residual=resid))
    ref4 = adapter_reference(x, params_rnd, scale=0.5, residual=resid)
    assert jnp.allclose(out4, ref4, atol=3e-2, rtol=3e-2), "mismatch (explicit res)"

    # ---- 5) ragged M (edge blocks handled by Pallas masking, no host pad) ---
    x5 = x[:, :7, :]                                       # M = 14, tm = 8 -> tail
    out5 = jax.block_until_ready(
        adapter_forward(x5, prep_rnd, prepared=True, scale=0.5))
    ref5 = adapter_reference(x5, params_rnd, scale=0.5)
    assert jnp.allclose(out5, ref5, atol=3e-2, rtol=3e-2), "mismatch (ragged M)"

    # ---- 6) bf16 I/O path (halved HBM traffic for bf16 callers) -------------
    x_bf = x.astype(jnp.bfloat16)
    out6 = jax.block_until_ready(
        adapter_forward(x_bf, prep_rnd, prepared=True, scale=0.5))
    ref6 = adapter_reference(x_bf.astype(jnp.float32), params_rnd, scale=0.5)
    assert out6.dtype == jnp.bfloat16
    assert jnp.allclose(out6.astype(jnp.float32), ref6, atol=1e-1, rtol=1e-1), \
        "mismatch (bf16 io)"

    print("KERNEL_OK")
</pallas_src>

<mosaic_0001>
module attributes {stable_mosaic.version = 11 : i64} {
  func.func @_kernel_no_res(%arg0: i32, %arg1: memref<8x32xf32, #tpu.memory_space<vmem>>, %arg2: memref<1x32xf32, #tpu.memory_space<vmem>>, %arg3: memref<1x32xf32, #tpu.memory_space<vmem>>, %arg4: memref<32x128xbf16, #tpu.memory_space<vmem>>, %arg5: memref<1x128xf32, #tpu.memory_space<vmem>>, %arg6: memref<128x32xbf16, #tpu.memory_space<vmem>>, %arg7: memref<1x32xf32, #tpu.memory_space<vmem>>, %arg8: memref<8x32xf32, #tpu.memory_space<vmem>>) attributes {dimension_semantics = [#tpu.dimension_semantics<parallel>], iteration_bounds = array<i64: 2>, scalar_prefetch = 0 : i64, scratch_operands = 0 : i64, tpu.core_type = #tpu.core_type<tc>, window_params = [{transform_indices = @transform_0, window_bounds = array<i64: 8, 32>}, {pipeline_mode = #tpu.pipeline_mode<synchronous>, transform_indices = @transform_1, window_bounds = array<i64: 1, 32>}, {pipeline_mode = #tpu.pipeline_mode<synchronous>, transform_indices = @transform_2, window_bounds = array<i64: 1, 32>}, {pipeline_mode = #tpu.pipeline_mode<synchronous>, transform_indices = @transform_3, window_bounds = array<i64: 32, 128>}, {pipeline_mode = #tpu.pipeline_mode<synchronous>, transform_indices = @transform_4, window_bounds = array<i64: 1, 128>}, {pipeline_mode = #tpu.pipeline_mode<synchronous>, transform_indices = @transform_5, window_bounds = array<i64: 128, 32>}, {pipeline_mode = #tpu.pipeline_mode<synchronous>, transform_indices = @transform_6, window_bounds = array<i64: 1, 32>}, {transform_indices = @transform_7, window_bounds = array<i64: 8, 32>}]} {
    %c0 = arith.constant 0 : index
    %c0_0 = arith.constant 0 : index
    %0 = vector.load %arg1[%c0, %c0_0] : memref<8x32xf32, #tpu.memory_space<vmem>>, vector<8x32xf32>
    %cst = arith.constant dense<0.000000e+00> : vector<8xf32>
    %1 = vector.multi_reduction <add>, %0, %cst [1] : vector<8x32xf32> to vector<8xf32>
    %2 = vector.shape_cast %1 : vector<8xf32> to vector<8x1xf32>
    %cst_1 = arith.constant 3.200000e+01 : f32
    %3 = vector.broadcast %cst_1 : f32 to vector<8x1xf32>
    %4 = arith.divf %2, %3 : vector<8x1xf32>
    %5 = vector.broadcast %4 : vector<8x1xf32> to vector<8x32xf32>
    %6 = arith.subf %0, %5 : vector<8x32xf32>
    %7 = arith.mulf %6, %6 : vector<8x32xf32>
    %cst_2 = arith.constant dense<0.000000e+00> : vector<8xf32>
    %8 = vector.multi_reduction <add>, %7, %cst_2 [1] : vector<8x32xf32> to vector<8xf32>
    %9 = vector.shape_cast %8 : vector<8xf32> to vector<8x1xf32>
    %cst_3 = arith.constant 3.200000e+01 : f32
    %10 = vector.broadcast %cst_3 : f32 to vector<8x1xf32>
    %11 = arith.divf %9, %10 : vector<8x1xf32>
    %cst_4 = arith.constant 9.99999974E-6 : f32
    %12 = vector.broadcast %cst_4 : f32 to vector<8x1xf32>
    %13 = arith.addf %11, %12 : vector<8x1xf32>
    %14 = math.rsqrt %13 : vector<8x1xf32>
    %15 = vector.broadcast %14 : vector<8x1xf32> to vector<8x32xf32>
    %16 = arith.mulf %6, %15 : vector<8x32xf32>
    %c0_5 = arith.constant 0 : index
    %c0_6 = arith.constant 0 : index
    %17 = vector.load %arg2[%c0_5, %c0_6] : memref<1x32xf32, #tpu.memory_space<vmem>>, vector<1x32xf32>
    %18 = vector.broadcast %17 : vector<1x32xf32> to vector<8x32xf32>
    %19 = arith.mulf %16, %18 : vector<8x32xf32>
    %c0_7 = arith.constant 0 : index
    %c0_8 = arith.constant 0 : index
    %20 = vector.load %arg3[%c0_7, %c0_8] : memref<1x32xf32, #tpu.memory_space<vmem>>, vector<1x32xf32>
    %21 = vector.broadcast %20 : vector<1x32xf32> to vector<8x32xf32>
    %22 = arith.addf %19, %21 : vector<8x32xf32>
    %23 = arith.truncf %22 : vector<8x32xf32> to vector<8x32xbf16>
    %c0_9 = arith.constant 0 : index
    %c0_10 = arith.constant 0 : index
    %24 = vector.load %arg4[%c0_9, %c0_10] : memref<32x128xbf16, #tpu.memory_space<vmem>>, vector<32x128xbf16>
    %cst_11 = arith.constant dense<0.000000e+00> : vector<8x128xf32>
    %25 = tpu.matmul %23, %24, %cst_11 {dimension_numbers = #tpu.dot_dimension_numbers<[1], [0], [0], [1], [0, 0, 1, 1], [], []>} : vector<8x32xbf16>, vector<32x128xbf16>, vector<8x128xf32> -> vector<8x128xf32>
    %c0_12 = arith.constant 0 : index
    %c0_13 = arith.constant 0 : index
    %26 = vector.load %arg5[%c0_12, %c0_13] : memref<1x128xf32, #tpu.memory_space<vmem>>, vector<1x128xf32>
    %27 = vector.broadcast %26 : vector<1x128xf32> to vector<8x128xf32>
    %28 = arith.addf %25, %27 : vector<8x128xf32>
    %cst_14 = arith.constant 0.000000e+00 : f32
    %29 = vector.broadcast %cst_14 : f32 to vector<8x128xf32>
    %30 = arith.maximumf %28, %29 : vector<8x128xf32>
    %31 = arith.truncf %30 : vector<8x128xf32> to vector<8x128xbf16>
    %c0_15 = arith.constant 0 : index
    %c0_16 = arith.constant 0 : index
    %32 = vector.load %arg6[%c0_15, %c0_16] : memref<128x32xbf16, #tpu.memory_space<vmem>>, vector<128x32xbf16>
    %cst_17 = arith.constant dense<0.000000e+00> : vector<8x32xf32>
    %33 = tpu.matmul %31, %32, %cst_17 {dimension_numbers = #tpu.dot_dimension_numbers<[1], [0], [0], [1], [0, 0, 1, 1], [], []>} : vector<8x128xbf16>, vector<128x32xbf16>, vector<8x32xf32> -> vector<8x32xf32>
    %c0_18 = arith.constant 0 : index
    %c0_19 = arith.constant 0 : index
    %34 = vector.load %arg7[%c0_18, %c0_19] : memref<1x32xf32, #tpu.memory_space<vmem>>, vector<1x32xf32>
    %35 = vector.broadcast %34 : vector<1x32xf32> to vector<8x32xf32>
    %36 = arith.addf %33, %35 : vector<8x32xf32>
    %cst_20 = arith.constant 1.000000e+00 : f32
    %37 = vector.broadcast %cst_20 : f32 to vector<8x32xf32>
    %38 = arith.mulf %36, %37 : vector<8x32xf32>
    %c0_21 = arith.constant 0 : index
    %c0_22 = arith.constant 0 : index
    %39 = vector.load %arg1[%c0_21, %c0_22] : memref<8x32xf32, #tpu.memory_space<vmem>>, vector<8x32xf32>
    %40 = arith.addf %38, %39 : vector<8x32xf32>
    %c0_23 = arith.constant 0 : index
    %c0_24 = arith.constant 0 : index
    %41 = vector.load %arg8[%c0_23, %c0_24] : memref<8x32xf32, #tpu.memory_space<vmem>>, vector<8x32xf32>
    tpu.vector_store %arg8[%c0_23, %c0_24], %40 {strides = array<i32>} : memref<8x32xf32, #tpu.memory_space<vmem>>, vector<8x32xf32>,
    return
  }
  func.func @transform_0(%arg0: i32) -> (i32, i32) {
    %c0_i32 = arith.constant 0 : i32
    %c0_i32_0 = arith.constant 0 : i32
    return %arg0, %c0_i32 : i32, i32
  }
  func.func @transform_1(%arg0: i32) -> (i32, i32) {
    %c0_i32 = arith.constant 0 : i32
    %c0_i32_0 = arith.constant 0 : i32
    %c0_i32_1 = arith.constant 0 : i32
    return %c0_i32, %c0_i32_0 : i32, i32
  }
  func.func @transform_2(%arg0: i32) -> (i32, i32) {
    %c0_i32 = arith.constant 0 : i32
    %c0_i32_0 = arith.constant 0 : i32
    %c0_i32_1 = arith.constant 0 : i32
    return %c0_i32, %c0_i32_0 : i32, i32
  }
  func.func @transform_3(%arg0: i32) -> (i32, i32) {
    %c0_i32 = arith.constant 0 : i32
    %c0_i32_0 = arith.constant 0 : i32
    %c0_i32_1 = arith.constant 0 : i32
    return %c0_i32, %c0_i32_0 : i32, i32
  }
  func.func @transform_4(%arg0: i32) -> (i32, i32) {
    %c0_i32 = arith.constant 0 : i32
    %c0_i32_0 = arith.constant 0 : i32
    %c0_i32_1 = arith.constant 0 : i32
    return %c0_i32, %c0_i32_0 : i32, i32
  }
  func.func @transform_5(%arg0: i32) -> (i32, i32) {
    %c0_i32 = arith.constant 0 : i32
    %c0_i32_0 = arith.constant 0 : i32
    %c0_i32_1 = arith.constant 0 : i32
    return %c0_i32, %c0_i32_0 : i32, i32
  }
  func.func @transform_6(%arg0: i32) -> (i32, i32) {
    %c0_i32 = arith.constant 0 : i32
    %c0_i32_0 = arith.constant 0 : i32
    %c0_i32_1 = arith.constant 0 : i32
    return %c0_i32, %c0_i32_0 : i32, i32
  }
  func.func @transform_7(%arg0: i32) -> (i32, i32) {
    %c0_i32 = arith.constant 0 : i32
    %c0_i32_0 = arith.constant 0 : i32
    return %arg0, %c0_i32 : i32, i32
  }
}

module attributes {stable_mosaic.version = 11 : i64} {
  func.func @_kernel_no_res(%arg0: i32, %arg1: memref<8x32xf32, #tpu.memory_space<vmem>>, %arg2: memref<1x32xf32, #tpu.memory_space<vmem>>, %arg3: memref<1x32xf32, #tpu.memory_space<vmem>>, %arg4: memref<32x128xbf16, #tpu.memory_space<vmem>>, %arg5: memref<1x128xf32, #tpu.memory_space<vmem>>, %arg6: memref<128x32xbf16, #tpu.memory_space<vmem>>, %arg7: memref<1x32xf32, #tpu.memory_space<vmem>>, %arg8: memref<8x32xf32, #tpu.memory_space<vmem>>) attributes {dimension_semantics = [#tpu.dimension_semantics<parallel>], iteration_bounds = array<i64: 2>, scalar_prefetch = 0 : i64, scratch_operands = 0 : i64, tpu.core_type = #tpu.core_type<tc>, window_params = [{transform_indices = @transform_0, window_bounds = array<i64: 8, 32>}, {pipeline_mode = #tpu.pipeline_mode<synchronous>, transform_indices = @transform_1, window_bounds = array<i64: 1, 32>}, {pipeline_mode = #tpu.pipeline_mode<synchronous>, transform_indices = @transform_2, window_bounds = array<i64: 1, 32>}, {pipeline_mode = #tpu.pipeline_mode<synchronous>, transform_indices = @transform_3, window_bounds = array<i64: 32, 128>}, {pipeline_mode = #tpu.pipeline_mode<synchronous>, transform_indices = @transform_4, window_bounds = array<i64: 1, 128>}, {pipeline_mode = #tpu.pipeline_mode<synchronous>, transform_indices = @transform_5, window_bounds = array<i64: 128, 32>}, {pipeline_mode = #tpu.pipeline_mode<synchronous>, transform_indices = @transform_6, window_bounds = array<i64: 1, 32>}, {transform_indices = @transform_7, window_bounds = array<i64: 8, 32>}]} {
    %c0 = arith.constant 0 : index
    %c0_0 = arith.constant 0 : index
    %0 = vector.load %arg1[%c0, %c0_0] : memref<8x32xf32, #tpu.memory_space<vmem>>, vector<8x32xf32>
    %cst = arith.constant dense<0.000000e+00> : vector<8xf32>
    %1 = vector.multi_reduction <add>, %0, %cst [1] : vector<8x32xf32> to vector<8xf32>
    %2 = vector.shape_cast %1 : vector<8xf32> to vector<8x1xf32>
    %cst_1 = arith.constant 3.200000e+01 : f32
    %3 = vector.broadcast %cst_1 : f32 to vector<8x1xf32>
    %4 = arith.divf %2, %3 : vector<8x1xf32>
    %5 = vector.broadcast %4 : vector<8x1xf32> to vector<8x32xf32>
    %6 = arith.subf %0, %5 : vector<8x32xf32>
    %7 = arith.mulf %6, %6 : vector<8x32xf32>
    %cst_2 = arith.constant dense<0.000000e+00> : vector<8xf32>
    %8 = vector.multi_reduction <add>, %7, %cst_2 [1] : vector<8x32xf32> to vector<8xf32>
    %9 = vector.shape_cast %8 : vector<8xf32> to vector<8x1xf32>
    %cst_3 = arith.constant 3.200000e+01 : f32
    %10 = vector.broadcast %cst_3 : f32 to vector<8x1xf32>
    %11 = arith.divf %9, %10 : vector<8x1xf32>
    %cst_4 = arith.constant 9.99999974E-6 : f32
    %12 = vector.broadcast %cst_4 : f32 to vector<8x1xf32>
    %13 = arith.addf %11, %12 : vector<8x1xf32>
    %14 = math.rsqrt %13 : vector<8x1xf32>
    %15 = vector.broadcast %14 : vector<8x1xf32> to vector<8x32xf32>
    %16 = arith.mulf %6, %15 : vector<8x32xf32>
    %c0_5 = arith.constant 0 : index
    %c0_6 = arith.constant 0 : index
    %17 = vector.load %arg2[%c0_5, %c0_6] : memref<1x32xf32, #tpu.memory_space<vmem>>, vector<1x32xf32>
    %18 = vector.broadcast %17 : vector<1x32xf32> to vector<8x32xf32>
    %19 = arith.mulf %16, %18 : vector<8x32xf32>
    %c0_7 = arith.constant 0 : index
    %c0_8 = arith.constant 0 : index
    %20 = vector.load %arg3[%c0_7, %c0_8] : memref<1x32xf32, #tpu.memory_space<vmem>>, vector<1x32xf32>
    %21 = vector.broadcast %20 : vector<1x32xf32> to vector<8x32xf32>
    %22 = arith.addf %19, %21 : vector<8x32xf32>
    %23 = arith.truncf %22 : vector<8x32xf32> to vector<8x32xbf16>
    %c0_9 = arith.constant 0 : index
    %c0_10 = arith.constant 0 : index
    %24 = vector.load %arg4[%c0_9, %c0_10] : memref<32x128xbf16, #tpu.memory_space<vmem>>, vector<32x128xbf16>
    %cst_11 = arith.constant dense<0.000000e+00> : vector<8x128xf32>
    %25 = tpu.matmul %23, %24, %cst_11 {dimension_numbers = #tpu.dot_dimension_numbers<[1], [0], [0], [1], [0, 0, 1, 1], [], []>} : vector<8x32xbf16>, vector<32x128xbf16>, vector<8x128xf32> -> vector<8x128xf32>
    %c0_12 = arith.constant 0 : index
    %c0_13 = arith.constant 0 : index
    %26 = vector.load %arg5[%c0_12, %c0_13] : memref<1x128xf32, #tpu.memory_space<vmem>>, vector<1x128xf32>
    %27 = vector.broadcast %26 : vector<1x128xf32> to vector<8x128xf32>
    %28 = arith.addf %25, %27 : vector<8x128xf32>
    %cst_14 = arith.constant 0.000000e+00 : f32
    %29 = vector.broadcast %cst_14 : f32 to vector<8x128xf32>
    %30 = arith.maximumf %28, %29 : vector<8x128xf32>
    %31 = arith.truncf %30 : vector<8x128xf32> to vector<8x128xbf16>
    %c0_15 = arith.constant 0 : index
    %c0_16 = arith.constant 0 : index
    %32 = vector.load %arg6[%c0_15, %c0_16] : memref<128x32xbf16, #tpu.memory_space<vmem>>, vector<128x32xbf16>
    %cst_17 = arith.constant dense<0.000000e+00> : vector<8x32xf32>
    %33 = tpu.matmul %31, %32, %cst_17 {dimension_numbers = #tpu.dot_dimension_numbers<[1], [0], [0], [1], [0, 0, 1, 1], [], []>} : vector<8x128xbf16>, vector<128x32xbf16>, vector<8x32xf32> -> vector<8x32xf32>
    %c0_18 = arith.constant 0 : index
    %c0_19 = arith.constant 0 : index
    %34 = vector.load %arg7[%c0_18, %c0_19] : memref<1x32xf32, #tpu.memory_space<vmem>>, vector<1x32xf32>
    %35 = vector.broadcast %34 : vector<1x32xf32> to vector<8x32xf32>
    %36 = arith.addf %33, %35 : vector<8x32xf32>
    %cst_20 = arith.constant 1.000000e+00 : f32
    %37 = vector.broadcast %cst_20 : f32 to vector<8x32xf32>
    %38 = arith.mulf %36, %37 : vector<8x32xf32>
    %c0_21 = arith.constant 0 : index
    %c0_22 = arith.constant 0 : index
    %39 = vector.load %arg1[%c0_21, %c0_22] : memref<8x32xf32, #tpu.memory_space<vmem>>, vector<8x32xf32>
    %40 = arith.addf %38, %39 : vector<8x32xf32>
    %c0_23 = arith.constant 0 : index
    %c0_24 = arith.constant 0 : index
    %41 = vector.load %arg8[%c0_23, %c0_24] : memref<8x32xf32, #tpu.memory_space<vmem>>, vector<8x32xf32>
    tpu.vector_store %arg8[%c0_23, %c0_24], %40 {strides = array<i32>} : memref<8x32xf32, #tpu.memory_space<vmem>>, vector<8x32xf32>,
    return
  }
  func.func @transform_0(%arg0: i32) -> (i32, i32) {
    %c0_i32 = arith.constant 0 : i32
    %c0_i32_0 = arith.constant 0 : i32
    return %arg0, %c0_i32 : i32, i32
  }
  func.func @transform_1(%arg0: i32) -> (i32, i32) {
    %c0_i32 = arith.constant 0 : i32
    %c0_i32_0 = arith.constant 0 : i32
    %c0_i32_1 = arith.constant 0 : i32
    return %c0_i32, %c0_i32_0 : i32, i32
  }
  func.func @transform_2(%arg0: i32) -> (i32, i32) {
    %c0_i32 = arith.constant 0 : i32
    %c0_i32_0 = arith.constant 0 : i32
    %c0_i32_1 = arith.constant 0 : i32
    return %c0_i32, %c0_i32_0 : i32, i32
  }
  func.func @transform_3(%arg0: i32) -> (i32, i32) {
    %c0_i32 = arith.constant 0 : i32
    %c0_i32_0 = arith.constant 0 : i32
    %c0_i32_1 = arith.constant 0 : i32
    return %c0_i32, %c0_i32_0 : i32, i32
  }
  func.func @transform_4(%arg0: i32) -> (i32, i32) {
    %c0_i32 = arith.constant 0 : i32
    %c0_i32_0 = arith.constant 0 : i32
    %c0_i32_1 = arith.constant 0 : i32
    return %c0_i32, %c0_i32_0 : i32, i32
  }
  func.func @transform_5(%arg0: i32) -> (i32, i32) {
    %c0_i32 = arith.constant 0 : i32
    %c0_i32_0 = arith.constant 0 : i32
    %c0_i32_1 = arith.constant 0 : i32
    return %c0_i32, %c0_i32_0 : i32, i32
  }
  func.func @transform_6(%arg0: i32) -> (i32, i32) {
    %c0_i32 = arith.constant 0 : i32
    %c0_i32_0 = arith.constant 0 : i32
    %c0_i32_1 = arith.constant 0 : i32
    return %c0_i32, %c0_i32_0 : i32, i32
  }
  func.func @transform_7(%arg0: i32) -> (i32, i32) {
    %c0_i32 = arith.constant 0 : i32
    %c0_i32_0 = arith.constant 0 : i32
    return %arg0, %c0_i32 : i32, i32
  }
}

</mosaic_0001>

<llo_original>
// kernel: tpu_custom_call.1
$region0: #{tpu_custom_call.1}
  #allocation0 [shape = 'u32[]', space=smem, size = 0x4, offset = 0x4, fixed_abs, tag = 'smem constant byte address 0x4 - core index']
  #allocation1 [shape = 'u32[72,128]{1,0:T(1,128)}', space=vmem, size = 0x9000, scoped, tag = 'internal scratch']
  %s0 = inlined_call_operand.vmem [shape: f32[16,32], index: 0, kind: input, shape index: {}]
  %s1 = inlined_call_operand.vmem [shape: f32[1,32], index: 1, kind: input, shape index: {}]
  %s2 = inlined_call_operand.vmem [shape: f32[1,32], index: 2, kind: input, shape index: {}]
  %s3 = inlined_call_operand.vmem [shape: bf16[32,128], index: 3, kind: input, shape index: {}]
  %s4 = inlined_call_operand.vmem [shape: f32[1,128], index: 4, kind: input, shape index: {}]
  %s5 = inlined_call_operand.vmem [shape: bf16[128,32], index: 5, kind: input, shape index: {}]
  %s6 = inlined_call_operand.vmem [shape: f32[1,32], index: 6, kind: input, shape index: {}]
  %s7 = inlined_call_operand.hbm [shape: f32[16,32], index: 7, kind: output, shape index: {}]
  %s8 = sld [smem:[#allocation0]]
  $region61: #{tpu_custom_call.1} parent=0
    _
  %s10 = ssub.s32 1, %s8
  %s11 = scalar_select 0, %s10, %s8
  $region1: #{tpu_custom_call.1} parent=0
    #allocation2 [shape = 'u8[8192]{0}', space=vmem, size = 0x2000, scoped, tag = 'output window, operand 0']
    #allocation3 [shape = 's32[2]{0}', space=sflag, size = 0x8, scoped, tag = 'scoped memory for tpu_custom_call.1']
    %12 = vsyncpa [#allocation3], 0
    %s13 = scalar_lea.sflag [#allocation3], 1
    %14 = vsyncpa %s13, 0
    loop: start=0, step=1, limit=4
    $region2: #{tpu_custom_call.1} parent=1 // loop_pre_header
      _
    $region3: #{tpu_custom_call.1} parent=1 // loop_header
      %s16 = sphi 0, %s20
      %p17 = scmp.ge.s32.totalorder %s16, 4
      %s26 = sphi 0, %s28
      %s29 = sphi 0, %s26
      %s30 = sphi 0, %s29
      %s46 = sphi 0, %s30
      %s50 = sphi 0, %s50
      %s52 = sphi 0, %s50
      %s53 = sphi 0, %s52
      %s67 = sphi 0, %s53
      %s71 = sphi 0, %s71
      %s73 = sphi 0, %s71
      %s74 = sphi 0, %s73
      %s88 = sphi 0, %s74
      %s92 = sphi 0, %s92
      %s94 = sphi 0, %s92
      %s95 = sphi 0, %s94
      %s109 = sphi 0, %s95
      %s113 = sphi 0, %s113
      %s115 = sphi 0, %s113
      %s116 = sphi 0, %s115
      %s130 = sphi 0, %s116
      %s134 = sphi 0, %s134
      %s136 = sphi 0, %s134
      %s137 = sphi 0, %s136
      %s151 = sphi 0, %s137
      %s155 = sphi 0, %s155
      %s157 = sphi 0, %s155
      %s158 = sphi 0, %s157
      %s172 = sphi 0, %s158
      %s178 = sphi 0, %s180
      %s181 = sphi 0, %s178
      %s182 = sphi 0, %s181
      %s198 = sphi 0, %s182
    $region4: #{tpu_custom_call.1} parent=1 // loop_header_branch
      %19 = sbr.rel (%p17) target = $region8
    $region5: #{tpu_custom_call.1} parent=1 // loop_body
      %s21 = ssub.s32 %s16, 1
      %s22 = ssub.s32 %s16, 2
      %s23 = sadd.s32 %s16, 1
      %s24 = ssub.s32 %s16, %s23
      %p25 = scmp.eq.s32.totalorder %s24, 0
      %s27 = sadd.s32 %s26, 1
      %s28 = scalar_select %p25, %s26, %s27
      %p31 = pneg %p25
      %p32 = scmp.eq.s32.totalorder %s16, 1
      %p33 = por %p31, %p32
      %p34 = scmp.ne.s32.totalorder %s26, %s29
      %p35 = scmp.eq.s32.totalorder %s16, 0
      %p36 = por %p34, %p35
      %p37 = scmp.ne.s32.totalorder %s26, %s29
      %p38 = scmp.eq.s32.totalorder %s21, 1
      %p39 = por %p37, %p38
      %p40 = scmp.ne.s32.totalorder %s29, %s30
      %p41 = scmp.eq.s32.totalorder %s21, 0
      %p42 = por %p40, %p41
      %p43 = scmp.ne.s32.totalorder %s29, %s30
      %p44 = scmp.eq.s32.totalorder %s22, 1
      %p45 = por %p43, %p44
      %p47 = scmp.ne.s32.totalorder %s30, %s46
      %p48 = scmp.eq.s32.totalorder %s22, 0
      %p49 = por %p47, %p48
      %s51 = sadd.s32 %s50, 1
      %p54 = scmp.eq.s32.totalorder %s16, 1
      %p55 = scmp.ne.s32.totalorder %s50, %s52
      %p56 = scmp.eq.s32.totalorder %s16, 0
      %p57 = por %p55, %p56
      %p58 = scmp.ne.s32.totalorder %s50, %s52
      %p59 = scmp.eq.s32.totalorder %s21, 1
      %p60 = por %p58, %p59
      %p61 = scmp.ne.s32.totalorder %s52, %s53
      %p62 = scmp.eq.s32.totalorder %s21, 0
      %p63 = por %p61, %p62
      %p64 = scmp.ne.s32.totalorder %s52, %s53
      %p65 = scmp.eq.s32.totalorder %s22, 1
      %p66 = por %p64, %p65
      %p68 = scmp.ne.s32.totalorder %s53, %s67
      %p69 = scmp.eq.s32.totalorder %s22, 0
      %p70 = por %p68, %p69
      %s72 = sadd.s32 %s71, 1
      %p75 = scmp.eq.s32.totalorder %s16, 1
      %p76 = scmp.ne.s32.totalorder %s71, %s73
      %p77 = scmp.eq.s32.totalorder %s16, 0
      %p78 = por %p76, %p77
      %p79 = scmp.ne.s32.totalorder %s71, %s73
      %p80 = scmp.eq.s32.totalorder %s21, 1
      %p81 = por %p79, %p80
      %p82 = scmp.ne.s32.totalorder %s73, %s74
      %p83 = scmp.eq.s32.totalorder %s21, 0
      %p84 = por %p82, %p83
      %p85 = scmp.ne.s32.totalorder %s73, %s74
      %p86 = scmp.eq.s32.totalorder %s22, 1
      %p87 = por %p85, %p86
      %p89 = scmp.ne.s32.totalorder %s74, %s88
      %p90 = scmp.eq.s32.totalorder %s22, 0
      %p91 = por %p89, %p90
      %s93 = sadd.s32 %s92, 1
      %p96 = scmp.eq.s32.totalorder %s16, 1
      %p97 = scmp.ne.s32.totalorder %s92, %s94
      %p98 = scmp.eq.s32.totalorder %s16, 0
      %p99 = por %p97, %p98
      %p100 = scmp.ne.s32.totalorder %s92, %s94
      %p101 = scmp.eq.s32.totalorder %s21, 1
      %p102 = por %p100, %p101
      %p103 = scmp.ne.s32.totalorder %s94, %s95
      %p104 = scmp.eq.s32.totalorder %s21, 0
      %p105 = por %p103, %p104
      %p106 = scmp.ne.s32.totalorder %s94, %s95
      %p107 = scmp.eq.s32.totalorder %s22, 1
      %p108 = por %p106, %p107
      %p110 = scmp.ne.s32.totalorder %s95, %s109
      %p111 = scmp.eq.s32.totalorder %s22, 0
      %p112 = por %p110, %p111
      %s114 = sadd.s32 %s113, 1
      %p117 = scmp.eq.s32.totalorder %s16, 1
      %p118 = scmp.ne.s32.totalorder %s113, %s115
      %p119 = scmp.eq.s32.totalorder %s16, 0
      %p120 = por %p118, %p119
      %p121 = scmp.ne.s32.totalorder %s113, %s115
      %p122 = scmp.eq.s32.totalorder %s21, 1
      %p123 = por %p121, %p122
      %p124 = scmp.ne.s32.totalorder %s115, %s116
      %p125 = scmp.eq.s32.totalorder %s21, 0
      %p126 = por %p124, %p125
      %p127 = scmp.ne.s32.totalorder %s115, %s116
      %p128 = scmp.eq.s32.totalorder %s22, 1
      %p129 = por %p127, %p128
      %p131 = scmp.ne.s32.totalorder %s116, %s130
      %p132 = scmp.eq.s32.totalorder %s22, 0
      %p133 = por %p131, %p132
      %s135 = sadd.s32 %s134, 1
      %p138 = scmp.eq.s32.totalorder %s16, 1
      %p139 = scmp.ne.s32.totalorder %s134, %s136
      %p140 = scmp.eq.s32.totalorder %s16, 0
      %p141 = por %p139, %p140
      %p142 = scmp.ne.s32.totalorder %s134, %s136
      %p143 = scmp.eq.s32.totalorder %s21, 1
      %p144 = por %p142, %p143
      %p145 = scmp.ne.s32.totalorder %s136, %s137
      %p146 = scmp.eq.s32.totalorder %s21, 0
      %p147 = por %p145, %p146
      %p148 = scmp.ne.s32.totalorder %s136, %s137
      %p149 = scmp.eq.s32.totalorder %s22, 1
      %p150 = por %p148, %p149
      %p152 = scmp.ne.s32.totalorder %s137, %s151
      %p153 = scmp.eq.s32.totalorder %s22, 0
      %p154 = por %p152, %p153
      %s156 = sadd.s32 %s155, 1
      %p159 = scmp.eq.s32.totalorder %s16, 1
      %p160 = scmp.ne.s32.totalorder %s155, %s157
      %p161 = scmp.eq.s32.totalorder %s16, 0
      %p162 = por %p160, %p161
      %p163 = scmp.ne.s32.totalorder %s155, %s157
      %p164 = scmp.eq.s32.totalorder %s21, 1
      %p165 = por %p163, %p164
      %p166 = scmp.ne.s32.totalorder %s157, %s158
      %p167 = scmp.eq.s32.totalorder %s21, 0
      %p168 = por %p166, %p167
      %p169 = scmp.ne.s32.totalorder %s157, %s158
      %p170 = scmp.eq.s32.totalorder %s22, 1
      %p171 = por %p169, %p170
      %p173 = scmp.ne.s32.totalorder %s158, %s172
      %p174 = scmp.eq.s32.totalorder %s22, 0
      %p175 = por %p173, %p174
      %s176 = ssub.s32 %s16, %s23
      %p177 = scmp.eq.s32.totalorder %s176, 0
      %s179 = sadd.s32 %s178, 1
      %s180 = scalar_select %p177, %s178, %s179
      %p183 = pneg %p177
      %p184 = scmp.eq.s32.totalorder %s16, 1
      %p185 = por %p183, %p184
      %p186 = scmp.ne.s32.totalorder %s178, %s181
      %p187 = scmp.eq.s32.totalorder %s16, 0
      %p188 = por %p186, %p187
      %p189 = scmp.ne.s32.totalorder %s178, %s181
      %p190 = scmp.eq.s32.totalorder %s21, 1
      %p191 = por %p189, %p190
      %p192 = scmp.ne.s32.totalorder %s181, %s182
      %p193 = scmp.eq.s32.totalorder %s21, 0
      %p194 = por %p192, %p193
      %p195 = scmp.ne.s32.totalorder %s181, %s182
      %p196 = scmp.eq.s32.totalorder %s22, 1
      %p197 = por %p195, %p196
      %p199 = scmp.ne.s32.totalorder %s182, %s198
      %p200 = scmp.eq.s32.totalorder %s22, 0
      %p201 = por %p199, %p200
      %p202 = scmp.le.s32.totalorder 1, %s16
      %p203 = scmp.lt.s32.totalorder %s16, 3
      %p204 = pnand %p202, %p203
      %p205 = pneg %p204
      // Predicated region
      $region9: #{tpu_custom_call.1} parent=5 // pred_check
        _
      $region10: #{tpu_custom_call.1} parent=5 // pred_check_branch
        %207 = sbr.rel (%p204) target = $region12
      $region11: #{tpu_custom_call.1} parent=5 // pred_region
        %s208 = ssub.s32 %s16, 1
        // Predicated region
        $region13: #{tpu_custom_call.1} parent=11 // pred_check
          %p209 = pneg %p63
        $region14: #{tpu_custom_call.1} parent=11 // pred_check_branch
          %211 = sbr.rel (%p209) target = $region16
        $region15: #{tpu_custom_call.1} parent=11 // pred_region
          _
        $region16: #{tpu_custom_call.1} parent=11 // pred_fallthru
          _
        // Predicated region
        $region17: #{tpu_custom_call.1} parent=11 // pred_check
          %p212 = pneg %p84
        $region18: #{tpu_custom_call.1} parent=11 // pred_check_branch
          %214 = sbr.rel (%p212) target = $region20
        $region19: #{tpu_custom_call.1} parent=11 // pred_region
          _
        $region20: #{tpu_custom_call.1} parent=11 // pred_fallthru
          _
        // Predicated region
        $region21: #{tpu_custom_call.1} parent=11 // pred_check
          %p215 = pneg %p105
        $region22: #{tpu_custom_call.1} parent=11 // pred_check_branch
          %217 = sbr.rel (%p215) target = $region24
        $region23: #{tpu_custom_call.1} parent=11 // pred_region
          _
        $region24: #{tpu_custom_call.1} parent=11 // pred_fallthru
          _
        // Predicated region
        $region25: #{tpu_custom_call.1} parent=11 // pred_check
          %p218 = pneg %p126
        $region26: #{tpu_custom_call.1} parent=11 // pred_check_branch
          %220 = sbr.rel (%p218) target = $region28
        $region27: #{tpu_custom_call.1} parent=11 // pred_region
          _
        $region28: #{tpu_custom_call.1} parent=11 // pred_fallthru
          _
        // Predicated region
        $region29: #{tpu_custom_call.1} parent=11 // pred_check
          %p221 = pneg %p147
        $region30: #{tpu_custom_call.1} parent=11 // pred_check_branch
          %223 = sbr.rel (%p221) target = $region32
        $region31: #{tpu_custom_call.1} parent=11 // pred_region
          _
        $region32: #{tpu_custom_call.1} parent=11 // pred_fallthru
          _
        // Predicated region
        $region33: #{tpu_custom_call.1} parent=11 // pred_check
          %p224 = pneg %p168
        $region34: #{tpu_custom_call.1} parent=11 // pred_check_branch
          %226 = sbr.rel (%p224) target = $region36
        $region35: #{tpu_custom_call.1} parent=11 // pred_region
          _
        $region36: #{tpu_custom_call.1} parent=11 // pred_fallthru
          _
      $region12: #{tpu_custom_call.1} parent=5 // pred_fallthru
        _
      %p227 = scmp.lt.s32.totalorder %s16, 2
      // Predicated region
      $region37: #{tpu_custom_call.1} parent=5 // pred_check
        %p228 = pneg %p227
      $region38: #{tpu_custom_call.1} parent=5 // pred_check_branch
        %230 = sbr.rel (%p228) target = $region40
      $region39: #{tpu_custom_call.1} parent=5 // pred_region
        // Predicated region
        $region41: #{tpu_custom_call.1} parent=39 // pred_check
          %p231 = pneg %p36
        $region42: #{tpu_custom_call.1} parent=39 // pred_check_branch
          %233 = sbr.rel (%p231) target = $region44
        $region43: #{tpu_custom_call.1} parent=39 // pred_region
          %p234 = scmp.lt.s32.totalorder %s16, 1
          %s235 = scalar_select %p234, %s16, 1
          %s236 = smul.addr %s235, 8
          %s237 = scalar_lea.vmem %s0, %s236
        $region44: #{tpu_custom_call.1} parent=39 // pred_fallthru
          _
      $region40: #{tpu_custom_call.1} parent=5 // pred_fallthru
        _
      %p238 = scmp.le.s32.totalorder 1, %s16
      %p239 = scmp.lt.s32.totalorder %s16, 3
      %p240 = pnand %p238, %p239
      %p241 = pneg %p240
      // Predicated region
      $region45: #{tpu_custom_call.1} parent=5 // pred_check
        _
      $region46: #{tpu_custom_call.1} parent=5 // pred_check_branch
        %243 = sbr.rel (%p240) target = $region48
      $region47: #{tpu_custom_call.1} parent=5 // pred_region
        %s244 = ssub.s32 %s16, 1
        %p245 = scmp.lt.s32.totalorder %s21, 1
        %s246 = scalar_select %p245, %s21, 1
        %s247 = smul.addr %s246, 8
        %s248 = scalar_lea.vmem %s0, %s247
        %p249 = pneg %p42
        %p250 = pneg %p39
        %p251 = pneg %p63
        %p252 = pneg %p60
        %p253 = pneg %p84
        %p254 = pneg %p81
        %p255 = pneg %p105
        %p256 = pneg %p102
        %p257 = pneg %p126
        %p258 = pneg %p123
        %p259 = pneg %p147
        %p260 = pneg %p144
        %p261 = pneg %p168
        %p262 = pneg %p165
        %p263 = pneg %p194
        %p264 = pneg %p191
        %s265 = sand.u32 %s181, 1
        %s266 = scalar_lea.sflag [#allocation3], %s265
        %s267 = sand.u32 %s181, 1
        %s268 = smul.addr %s267, 8
        %s269 = scalar_lea.vmem [#allocation2], %s268
        %p270 = scmp.lt.s32.totalorder %s21, 1
        %s271 = scalar_select %p270, %s21, 1
        %s272 = smul.addr %s271, 8
        %s273 = scalar_lea.vmem %s0, %s272
        %v275 = vld [vmem:[%s273] sm:$0xff]
        %vm276 = vcmask 261120
        %v277 = vsel %vm276, %v275, 0.0
        %278 = vadd.xlane.f32.xlu0 %v277
        %v279 = vpop.xlane.xlu0 %278
        %v280 = vrcp.pop 32.0
        %v281 = vmul.f32 32.0, %v280
        %v282 = vsub.f32 1.0, %v281
        %v283 = vmul.f32 %v280, %v282
        %v284 = vadd.f32 %v280, %v283
        %vm285 = vweird.f32 %v280
        %v286 = vsel %vm285, %v280, %v284
        %v287 = vmul.f32 %v279, %v286
        %v288 = vsub.f32 %v275, %v287
        %v289 = vmul.f32 %v288, %v288
        %v290 = vsel %vm276, %v289, 0.0
        %291 = vadd.xlane.f32.xlu0 %v290
        %v292 = vpop.xlane.xlu0 %291
        %v293 = vmul.f32 %v292, %v286
        %v294 = vadd.f32 %v293, 1e-05
        %v295 = vrsqrt.pop %v294
        %v296 = vmul.f32 %v295, %v294
        %v297 = vmul.f32 %v296, %v295
        %v298 = vmul.f32 0.5, %v297
        %v299 = vsub.f32 1.5, %v298
        %v300 = vmul.f32 %v295, %v299
        %vm301 = vweird.f32 %v294
        %vm302 = vweird.f32 %v295
        %vm303 = vmor %vm301, %vm302
        %v304 = vsel %vm303, %v295, %v300
        %v305 = vmul.f32 %v288, %v304
        %v306 = vld [vmem:[%s1] sm:$0x1]
        %v308 = vperm.slane %v306, 0
        %v310 = vmul.f32 %v305, %v308
        %v311 = vld [vmem:[%s2] sm:$0x1]
        %v313 = vperm.slane %v311, 0
        %v315 = vadd.f32 %v310, %v313
        %v316 = vpack.c.bf16 %v315, %v315
        %v317 = vld [vmem:[%s3] sm:$0xf]
        %v318 = vld [vmem:[%s3 + $0x4] sm:$0xf]
        %v319 = vld [vmem:[%s3 + $0x8] sm:$0xf]
        %v320 = vld [vmem:[%s3 + $0xc] sm:$0xf]
        %v321 = vld [vmem:[%s4] sm:$0x1]
        %v323 = vperm.slane %v321, 0
        %v329 = vunpack.c.l.b16 %v317
        %v330 = vunpack.c.l.b16 %v318
        %v331 = vunpack.c.l.b16 %v319
        %v332 = vunpack.c.l.b16 %v320
        %v333 = vpack.c.b16 %v330, %v329
        %v334 = vpack.c.b16 %v332, %v331
        %v338 = vsel %vm276, %v316, 0
        %340 = vmatpush.bf16.msra.mxu0 0
        %341 = vmatpush.bf16.msra.mxu0 0
        %342 = vmatpush.bf16.msra.mxu0 0
        %343 = vmatpush.bf16.msra.mxu0 0
        %344 = vmatpush.bf16.msra.mxu0 0
        %345 = vmatpush.bf16.msra.mxu0 0
        %346 = vmatpush.bf16.msra.mxu0 %v334
        %347 = vmatpush.bf16.msra.mxu0 %v333
        %348 = vmatmul.bf16.gmra.mxu0 %v338
        %v349 = vpop.f32.mrf.mxu0
        %v350 = vadd.f32 %v323, %v349
        %v351 = vpop.f32.mrf.mxu0
        %352 = vdwg.mxu0
        %v353 = vmax.f32 %v350, 0.0
        %v354 = vpack.c.bf16 %v353, %v353
        %v355 = vld [vmem:[%s5] sm:$0xf]
        %v356 = vld [vmem:[%s5 + $0x4] sm:$0xf]
        %v357 = vld [vmem:[%s5 + $0x8] sm:$0xf]
        %v358 = vld [vmem:[%s5 + $0xc] sm:$0xf]
        %v359 = vld [vmem:[%s5 + $0x10] sm:$0xf]
        %v360 = vld [vmem:[%s5 + $0x14] sm:$0xf]
        %v361 = vld [vmem:[%s5 + $0x18] sm:$0xf]
        %v362 = vld [vmem:[%s5 + $0x1c] sm:$0xf]
        %v363 = vld [vmem:[%s5 + $0x20] sm:$0xf]
        %v364 = vld [vmem:[%s5 + $0x24] sm:$0xf]
        %v365 = vld [vmem:[%s5 + $0x28] sm:$0xf]
        %v366 = vld [vmem:[%s5 + $0x2c] sm:$0xf]
        %v367 = vld [vmem:[%s5 + $0x30] sm:$0xf]
        %v368 = vld [vmem:[%s5 + $0x34] sm:$0xf]
        %v369 = vld [vmem:[%s5 + $0x38] sm:$0xf]
        %v370 = vld [vmem:[%s5 + $0x3c] sm:$0xf]
        %v371 = vld [vmem:[%s6] sm:$0x1]
        %v373 = vperm.slane %v371, 0
        %v391 = vunpack.c.l.b16 %v355
        %v392 = vunpack.c.l.b16 %v356
        %v393 = vunpack.c.l.b16 %v357
        %v394 = vunpack.c.l.b16 %v358
        %v395 = vunpack.c.l.b16 %v359
        %v396 = vunpack.c.l.b16 %v360
        %v397 = vunpack.c.l.b16 %v361
        %v398 = vunpack.c.l.b16 %v362
        %v399 = vunpack.c.l.b16 %v363
        %v400 = vunpack.c.l.b16 %v364
        %v401 = vunpack.c.l.b16 %v365
        %v402 = vunpack.c.l.b16 %v366
        %v403 = vunpack.c.l.b16 %v367
        %v404 = vunpack.c.l.b16 %v368
        %v405 = vunpack.c.l.b16 %v369
        %v406 = vunpack.c.l.b16 %v370
        %v407 = vpack.c.b16 %v392, %v391
        %v408 = vpack.c.b16 %v394, %v393
        %v409 = vpack.c.b16 %v396, %v395
        %v410 = vpack.c.b16 %v398, %v397
        %v411 = vpack.c.b16 %v400, %v399
        %v412 = vpack.c.b16 %v402, %v401
        %v413 = vpack.c.b16 %v404, %v403
        %v414 = vpack.c.b16 %v406, %v405
        %423 = vmatpush.bf16.msra.mxu0 %v414
        %424 = vmatpush.bf16.msra.mxu0 %v413
        %425 = vmatpush.bf16.msra.mxu0 %v412
        %426 = vmatpush.bf16.msra.mxu0 %v411
        %427 = vmatpush.bf16.msra.mxu0 %v410
        %428 = vmatpush.bf16.msra.mxu0 %v409
        %429 = vmatpush.bf16.msra.mxu0 %v408
        %430 = vmatpush.bf16.msra.mxu0 %v407
        %431 = vmatmul.bf16.gmra.mxu0 %v354
        %v432 = vpop.f32.mrf.mxu0
        %v433 = vadd.f32 %v373, %v432
        %v434 = vpop.f32.mrf.mxu0
        %435 = vdwg.mxu0
        %v436 = vadd.f32 %v433, %v275
        %437 = vst.msk [vmem:[%s269] sm:$0xff] %vm276, %v436
        %s438 = sand.u32 %s181, 1
        %s439 = scalar_lea.sflag [#allocation3], %s438
        %s440 = sand.u32 %s181, 1
        %s441 = smul.addr %s440, 8
        %s442 = scalar_lea.vmem [#allocation2], %s441
        // Predicated region
        $region49: #{tpu_custom_call.1} parent=47 // pred_check
          %p443 = pneg %p191
        $region50: #{tpu_custom_call.1} parent=47 // pred_check_branch
          %445 = sbr.rel (%p443) target = $region52
        $region51: #{tpu_custom_call.1} parent=47 // pred_region
          %447 = vsyncadd %s439, 0
          %s448 = smul.addr %s21, 8
          %s449 = scalar_lea.hbm %s7, %s448
          %s451 = sshll.u32 %s442, 4
          %s452 = int_to_ptr.vmem [resolvable:$true] %s451
          %s453 = sshll.u32 %s449, 4
          %s454 = int_to_ptr.hbm [resolvable:$true] %s453
          %456 = dma.vmem_to_hbm [thread:$0]  %s452, 128, %s454, %s439
        $region52: #{tpu_custom_call.1} parent=47 // pred_fallthru
          _
      $region48: #{tpu_custom_call.1} parent=5 // pred_fallthru
        _
      %p457 = scmp.le.s32.totalorder 2, %s16
      // Predicated region
      $region53: #{tpu_custom_call.1} parent=5 // pred_check
        %p458 = pneg %p457
      $region54: #{tpu_custom_call.1} parent=5 // pred_check_branch
        %460 = sbr.rel (%p458) target = $region56
      $region55: #{tpu_custom_call.1} parent=5 // pred_region
        %s461 = ssub.s32 %s16, 2
        // Predicated region
        $region57: #{tpu_custom_call.1} parent=55 // pred_check
          %p462 = pneg %p197
        $region58: #{tpu_custom_call.1} parent=55 // pred_check_branch
          %464 = sbr.rel (%p462) target = $region60
        $region59: #{tpu_custom_call.1} parent=55 // pred_region
          %s465 = sand.u32 %s182, 1
          %s466 = scalar_lea.sflag [#allocation3], %s465
          %s467 = sand.u32 %s182, 1
          %s468 = smul.addr %s467, 8
          %s469 = scalar_lea.vmem [#allocation2], %s468
          %471 = dma.done %s466, 128
        $region60: #{tpu_custom_call.1} parent=55 // pred_fallthru
          _
      $region56: #{tpu_custom_call.1} parent=5 // pred_fallthru
        _
    $region6: #{tpu_custom_call.1} parent=1 // loop_footer
      %s20 = sadd.s32 1, %s16
    $region7: #{tpu_custom_call.1} parent=1 // loop_footer_branch
      %15 = sbr.rel target = $region3
    $region8: #{tpu_custom_call.1} parent=1 // loop_exit
      _
    %472 = vsyncpa [#allocation3], 1
    %s473 = scalar_lea.sflag [#allocation3], 1
    %474 = vsyncpa %s473, 1

// kernel: tpu_custom_call.1
$region0: #{tpu_custom_call.1}
  #allocation0 [shape = 'u32[]', space=smem, size = 0x4, offset = 0x4, fixed_abs, tag = 'smem constant byte address 0x4 - core index']
  #allocation1 [shape = 'u32[72,128]{1,0:T(1,128)}', space=vmem, size = 0x9000, scoped, tag = 'internal scratch']
  %s0 = inlined_call_operand.vmem [shape: f32[16,32], index: 0, kind: input, shape index: {}]
  %s1 = inlined_call_operand.vmem [shape: f32[1,32], index: 1, kind: input, shape index: {}]
  %s2 = inlined_call_operand.vmem [shape: f32[1,32], index: 2, kind: input, shape index: {}]
  %s3 = inlined_call_operand.vmem [shape: bf16[32,128], index: 3, kind: input, shape index: {}]
  %s4 = inlined_call_operand.vmem [shape: f32[1,128], index: 4, kind: input, shape index: {}]
  %s5 = inlined_call_operand.vmem [shape: bf16[128,32], index: 5, kind: input, shape index: {}]
  %s6 = inlined_call_operand.vmem [shape: f32[1,32], index: 6, kind: input, shape index: {}]
  %s7 = inlined_call_operand.hbm [shape: f32[16,32], index: 7, kind: output, shape index: {}]
  %s8 = sld [smem:[#allocation0]]
  $region61: #{tpu_custom_call.1} parent=0
    _
  %s10 = ssub.s32 1, %s8
  %s11 = scalar_select 0, %s10, %s8
  $region1: #{tpu_custom_call.1} parent=0
    #allocation2 [shape = 'u8[8192]{0}', space=vmem, size = 0x2000, scoped, tag = 'output window, operand 0']
    #allocation3 [shape = 's32[2]{0}', space=sflag, size = 0x8, scoped, tag = 'scoped memory for tpu_custom_call.1']
    %12 = vsyncpa [#allocation3], 0
    %s13 = scalar_lea.sflag [#allocation3], 1
    %14 = vsyncpa %s13, 0
    loop: start=0, step=1, limit=4
    $region2: #{tpu_custom_call.1} parent=1 // loop_pre_header
      _
    $region3: #{tpu_custom_call.1} parent=1 // loop_header
      %s16 = sphi 0, %s20
      %p17 = scmp.ge.s32.totalorder %s16, 4
      %s26 = sphi 0, %s28
      %s29 = sphi 0, %s26
      %s30 = sphi 0, %s29
      %s46 = sphi 0, %s30
      %s50 = sphi 0, %s50
      %s52 = sphi 0, %s50
      %s53 = sphi 0, %s52
      %s67 = sphi 0, %s53
      %s71 = sphi 0, %s71
      %s73 = sphi 0, %s71
      %s74 = sphi 0, %s73
      %s88 = sphi 0, %s74
      %s92 = sphi 0, %s92
      %s94 = sphi 0, %s92
      %s95 = sphi 0, %s94
      %s109 = sphi 0, %s95
      %s113 = sphi 0, %s113
      %s115 = sphi 0, %s113
      %s116 = sphi 0, %s115
      %s130 = sphi 0, %s116
      %s134 = sphi 0, %s134
      %s136 = sphi 0, %s134
      %s137 = sphi 0, %s136
      %s151 = sphi 0, %s137
      %s155 = sphi 0, %s155
      %s157 = sphi 0, %s155
      %s158 = sphi 0, %s157
      %s172 = sphi 0, %s158
      %s178 = sphi 0, %s180
      %s181 = sphi 0, %s178
      %s182 = sphi 0, %s181
      %s198 = sphi 0, %s182
    $region4: #{tpu_custom_call.1} parent=1 // loop_header_branch
      %19 = sbr.rel (%p17) target = $region8
    $region5: #{tpu_custom_call.1} parent=1 // loop_body
      %s21 = ssub.s32 %s16, 1
      %s22 = ssub.s32 %s16, 2
      %s23 = sadd.s32 %s16, 1
      %s24 = ssub.s32 %s16, %s23
      %p25 = scmp.eq.s32.totalorder %s24, 0
      %s27 = sadd.s32 %s26, 1
      %s28 = scalar_select %p25, %s26, %s27
      %p31 = pneg %p25
      %p32 = scmp.eq.s32.totalorder %s16, 1
      %p33 = por %p31, %p32
      %p34 = scmp.ne.s32.totalorder %s26, %s29
      %p35 = scmp.eq.s32.totalorder %s16, 0
      %p36 = por %p34, %p35
      %p37 = scmp.ne.s32.totalorder %s26, %s29
      %p38 = scmp.eq.s32.totalorder %s21, 1
      %p39 = por %p37, %p38
      %p40 = scmp.ne.s32.totalorder %s29, %s30
      %p41 = scmp.eq.s32.totalorder %s21, 0
      %p42 = por %p40, %p41
      %p43 = scmp.ne.s32.totalorder %s29, %s30
      %p44 = scmp.eq.s32.totalorder %s22, 1
      %p45 = por %p43, %p44
      %p47 = scmp.ne.s32.totalorder %s30, %s46
      %p48 = scmp.eq.s32.totalorder %s22, 0
      %p49 = por %p47, %p48
      %s51 = sadd.s32 %s50, 1
      %p54 = scmp.eq.s32.totalorder %s16, 1
      %p55 = scmp.ne.s32.totalorder %s50, %s52
      %p56 = scmp.eq.s32.totalorder %s16, 0
      %p57 = por %p55, %p56
      %p58 = scmp.ne.s32.totalorder %s50, %s52
      %p59 = scmp.eq.s32.totalorder %s21, 1
      %p60 = por %p58, %p59
      %p61 = scmp.ne.s32.totalorder %s52, %s53
      %p62 = scmp.eq.s32.totalorder %s21, 0
      %p63 = por %p61, %p62
      %p64 = scmp.ne.s32.totalorder %s52, %s53
      %p65 = scmp.eq.s32.totalorder %s22, 1
      %p66 = por %p64, %p65
      %p68 = scmp.ne.s32.totalorder %s53, %s67
      %p69 = scmp.eq.s32.totalorder %s22, 0
      %p70 = por %p68, %p69
      %s72 = sadd.s32 %s71, 1
      %p75 = scmp.eq.s32.totalorder %s16, 1
      %p76 = scmp.ne.s32.totalorder %s71, %s73
      %p77 = scmp.eq.s32.totalorder %s16, 0
      %p78 = por %p76, %p77
      %p79 = scmp.ne.s32.totalorder %s71, %s73
      %p80 = scmp.eq.s32.totalorder %s21, 1
      %p81 = por %p79, %p80
      %p82 = scmp.ne.s32.totalorder %s73, %s74
      %p83 = scmp.eq.s32.totalorder %s21, 0
      %p84 = por %p82, %p83
      %p85 = scmp.ne.s32.totalorder %s73, %s74
      %p86 = scmp.eq.s32.totalorder %s22, 1
      %p87 = por %p85, %p86
      %p89 = scmp.ne.s32.totalorder %s74, %s88
      %p90 = scmp.eq.s32.totalorder %s22, 0
      %p91 = por %p89, %p90
      %s93 = sadd.s32 %s92, 1
      %p96 = scmp.eq.s32.totalorder %s16, 1
      %p97 = scmp.ne.s32.totalorder %s92, %s94
      %p98 = scmp.eq.s32.totalorder %s16, 0
      %p99 = por %p97, %p98
      %p100 = scmp.ne.s32.totalorder %s92, %s94
      %p101 = scmp.eq.s32.totalorder %s21, 1
      %p102 = por %p100, %p101
      %p103 = scmp.ne.s32.totalorder %s94, %s95
      %p104 = scmp.eq.s32.totalorder %s21, 0
      %p105 = por %p103, %p104
      %p106 = scmp.ne.s32.totalorder %s94, %s95
      %p107 = scmp.eq.s32.totalorder %s22, 1
      %p108 = por %p106, %p107
      %p110 = scmp.ne.s32.totalorder %s95, %s109
      %p111 = scmp.eq.s32.totalorder %s22, 0
      %p112 = por %p110, %p111
      %s114 = sadd.s32 %s113, 1
      %p117 = scmp.eq.s32.totalorder %s16, 1
      %p118 = scmp.ne.s32.totalorder %s113, %s115
      %p119 = scmp.eq.s32.totalorder %s16, 0
      %p120 = por %p118, %p119
      %p121 = scmp.ne.s32.totalorder %s113, %s115
      %p122 = scmp.eq.s32.totalorder %s21, 1
      %p123 = por %p121, %p122
      %p124 = scmp.ne.s32.totalorder %s115, %s116
      %p125 = scmp.eq.s32.totalorder %s21, 0
      %p126 = por %p124, %p125
      %p127 = scmp.ne.s32.totalorder %s115, %s116
      %p128 = scmp.eq.s32.totalorder %s22, 1
      %p129 = por %p127, %p128
      %p131 = scmp.ne.s32.totalorder %s116, %s130
      %p132 = scmp.eq.s32.totalorder %s22, 0
      %p133 = por %p131, %p132
      %s135 = sadd.s32 %s134, 1
      %p138 = scmp.eq.s32.totalorder %s16, 1
      %p139 = scmp.ne.s32.totalorder %s134, %s136
      %p140 = scmp.eq.s32.totalorder %s16, 0
      %p141 = por %p139, %p140
      %p142 = scmp.ne.s32.totalorder %s134, %s136
      %p143 = scmp.eq.s32.totalorder %s21, 1
      %p144 = por %p142, %p143
      %p145 = scmp.ne.s32.totalorder %s136, %s137
      %p146 = scmp.eq.s32.totalorder %s21, 0
      %p147 = por %p145, %p146
      %p148 = scmp.ne.s32.totalorder %s136, %s137
      %p149 = scmp.eq.s32.totalorder %s22, 1
      %p150 = por %p148, %p149
      %p152 = scmp.ne.s32.totalorder %s137, %s151
      %p153 = scmp.eq.s32.totalorder %s22, 0
      %p154 = por %p152, %p153
      %s156 = sadd.s32 %s155, 1
      %p159 = scmp.eq.s32.totalorder %s16, 1
      %p160 = scmp.ne.s32.totalorder %s155, %s157
      %p161 = scmp.eq.s32.totalorder %s16, 0
      %p162 = por %p160, %p161
      %p163 = scmp.ne.s32.totalorder %s155, %s157
      %p164 = scmp.eq.s32.totalorder %s21, 1
      %p165 = por %p163, %p164
      %p166 = scmp.ne.s32.totalorder %s157, %s158
      %p167 = scmp.eq.s32.totalorder %s21, 0
      %p168 = por %p166, %p167
      %p169 = scmp.ne.s32.totalorder %s157, %s158
      %p170 = scmp.eq.s32.totalorder %s22, 1
      %p171 = por %p169, %p170
      %p173 = scmp.ne.s32.totalorder %s158, %s172
      %p174 = scmp.eq.s32.totalorder %s22, 0
      %p175 = por %p173, %p174
      %s176 = ssub.s32 %s16, %s23
      %p177 = scmp.eq.s32.totalorder %s176, 0
      %s179 = sadd.s32 %s178, 1
      %s180 = scalar_select %p177, %s178, %s179
      %p183 = pneg %p177
      %p184 = scmp.eq.s32.totalorder %s16, 1
      %p185 = por %p183, %p184
      %p186 = scmp.ne.s32.totalorder %s178, %s181
      %p187 = scmp.eq.s32.totalorder %s16, 0
      %p188 = por %p186, %p187
      %p189 = scmp.ne.s32.totalorder %s178, %s181
      %p190 = scmp.eq.s32.totalorder %s21, 1
      %p191 = por %p189, %p190
      %p192 = scmp.ne.s32.totalorder %s181, %s182
      %p193 = scmp.eq.s32.totalorder %s21, 0
      %p194 = por %p192, %p193
      %p195 = scmp.ne.s32.totalorder %s181, %s182
      %p196 = scmp.eq.s32.totalorder %s22, 1
      %p197 = por %p195, %p196
      %p199 = scmp.ne.s32.totalorder %s182, %s198
      %p200 = scmp.eq.s32.totalorder %s22, 0
      %p201 = por %p199, %p200
      %p202 = scmp.le.s32.totalorder 1, %s16
      %p203 = scmp.lt.s32.totalorder %s16, 3
      %p204 = pnand %p202, %p203
      %p205 = pneg %p204
      // Predicated region
      $region9: #{tpu_custom_call.1} parent=5 // pred_check
        _
      $region10: #{tpu_custom_call.1} parent=5 // pred_check_branch
        %207 = sbr.rel (%p204) target = $region12
      $region11: #{tpu_custom_call.1} parent=5 // pred_region
        %s208 = ssub.s32 %s16, 1
        // Predicated region
        $region13: #{tpu_custom_call.1} parent=11 // pred_check
          %p209 = pneg %p63
        $region14: #{tpu_custom_call.1} parent=11 // pred_check_branch
          %211 = sbr.rel (%p209) target = $region16
        $region15: #{tpu_custom_call.1} parent=11 // pred_region
          _
        $region16: #{tpu_custom_call.1} parent=11 // pred_fallthru
          _
        // Predicated region
        $region17: #{tpu_custom_call.1} parent=11 // pred_check
          %p212 = pneg %p84
        $region18: #{tpu_custom_call.1} parent=11 // pred_check_branch
          %214 = sbr.rel (%p212) target = $region20
        $region19: #{tpu_custom_call.1} parent=11 // pred_region
          _
        $region20: #{tpu_custom_call.1} parent=11 // pred_fallthru
          _
        // Predicated region
        $region21: #{tpu_custom_call.1} parent=11 // pred_check
          %p215 = pneg %p105
        $region22: #{tpu_custom_call.1} parent=11 // pred_check_branch
          %217 = sbr.rel (%p215) target = $region24
        $region23: #{tpu_custom_call.1} parent=11 // pred_region
          _
        $region24: #{tpu_custom_call.1} parent=11 // pred_fallthru
          _
        // Predicated region
        $region25: #{tpu_custom_call.1} parent=11 // pred_check
          %p218 = pneg %p126
        $region26: #{tpu_custom_call.1} parent=11 // pred_check_branch
          %220 = sbr.rel (%p218) target = $region28
        $region27: #{tpu_custom_call.1} parent=11 // pred_region
          _
        $region28: #{tpu_custom_call.1} parent=11 // pred_fallthru
          _
        // Predicated region
        $region29: #{tpu_custom_call.1} parent=11 // pred_check
          %p221 = pneg %p147
        $region30: #{tpu_custom_call.1} parent=11 // pred_check_branch
          %223 = sbr.rel (%p221) target = $region32
        $region31: #{tpu_custom_call.1} parent=11 // pred_region
          _
        $region32: #{tpu_custom_call.1} parent=11 // pred_fallthru
          _
        // Predicated region
        $region33: #{tpu_custom_call.1} parent=11 // pred_check
          %p224 = pneg %p168
        $region34: #{tpu_custom_call.1} parent=11 // pred_check_branch
          %226 = sbr.rel (%p224) target = $region36
        $region35: #{tpu_custom_call.1} parent=11 // pred_region
          _
        $region36: #{tpu_custom_call.1} parent=11 // pred_fallthru
          _
      $region12: #{tpu_custom_call.1} parent=5 // pred_fallthru
        _
      %p227 = scmp.lt.s32.totalorder %s16, 2
      // Predicated region
      $region37: #{tpu_custom_call.1} parent=5 // pred_check
        %p228 = pneg %p227
      $region38: #{tpu_custom_call.1} parent=5 // pred_check_branch
        %230 = sbr.rel (%p228) target = $region40
      $region39: #{tpu_custom_call.1} parent=5 // pred_region
        // Predicated region
        $region41: #{tpu_custom_call.1} parent=39 // pred_check
          %p231 = pneg %p36
        $region42: #{tpu_custom_call.1} parent=39 // pred_check_branch
          %233 = sbr.rel (%p231) target = $region44
        $region43: #{tpu_custom_call.1} parent=39 // pred_region
          %p234 = scmp.lt.s32.totalorder %s16, 1
          %s235 = scalar_select %p234, %s16, 1
          %s236 = smul.addr %s235, 8
          %s237 = scalar_lea.vmem %s0, %s236
        $region44: #{tpu_custom_call.1} parent=39 // pred_fallthru
          _
      $region40: #{tpu_custom_call.1} parent=5 // pred_fallthru
        _
      %p238 = scmp.le.s32.totalorder 1, %s16
      %p239 = scmp.lt.s32.totalorder %s16, 3
      %p240 = pnand %p238, %p239
      %p241 = pneg %p240
      // Predicated region
      $region45: #{tpu_custom_call.1} parent=5 // pred_check
        _
      $region46: #{tpu_custom_call.1} parent=5 // pred_check_branch
        %243 = sbr.rel (%p240) target = $region48
      $region47: #{tpu_custom_call.1} parent=5 // pred_region
        %s244 = ssub.s32 %s16, 1
        %p245 = scmp.lt.s32.totalorder %s21, 1
        %s246 = scalar_select %p245, %s21, 1
        %s247 = smul.addr %s246, 8
        %s248 = scalar_lea.vmem %s0, %s247
        %p249 = pneg %p42
        %p250 = pneg %p39
        %p251 = pneg %p63
        %p252 = pneg %p60
        %p253 = pneg %p84
        %p254 = pneg %p81
        %p255 = pneg %p105
        %p256 = pneg %p102
        %p257 = pneg %p126
        %p258 = pneg %p123
        %p259 = pneg %p147
        %p260 = pneg %p144
        %p261 = pneg %p168
        %p262 = pneg %p165
        %p263 = pneg %p194
        %p264 = pneg %p191
        %s265 = sand.u32 %s181, 1
        %s266 = scalar_lea.sflag [#allocation3], %s265
        %s267 = sand.u32 %s181, 1
        %s268 = smul.addr %s267, 8
        %s269 = scalar_lea.vmem [#allocation2], %s268
        %p270 = scmp.lt.s32.totalorder %s21, 1
        %s271 = scalar_select %p270, %s21, 1
        %s272 = smul.addr %s271, 8
        %s273 = scalar_lea.vmem %s0, %s272
        %v275 = vld [vmem:[%s273] sm:$0xff]
        %vm276 = vcmask 261120
        %v277 = vsel %vm276, %v275, 0.0
        %278 = vadd.xlane.f32.xlu0 %v277
        %v279 = vpop.xlane.xlu0 %278
        %v280 = vrcp.pop 32.0
        %v281 = vmul.f32 32.0, %v280
        %v282 = vsub.f32 1.0, %v281
        %v283 = vmul.f32 %v280, %v282
        %v284 = vadd.f32 %v280, %v283
        %vm285 = vweird.f32 %v280
        %v286 = vsel %vm285, %v280, %v284
        %v287 = vmul.f32 %v279, %v286
        %v288 = vsub.f32 %v275, %v287
        %v289 = vmul.f32 %v288, %v288
        %v290 = vsel %vm276, %v289, 0.0
        %291 = vadd.xlane.f32.xlu0 %v290
        %v292 = vpop.xlane.xlu0 %291
        %v293 = vmul.f32 %v292, %v286
        %v294 = vadd.f32 %v293, 1e-05
        %v295 = vrsqrt.pop %v294
        %v296 = vmul.f32 %v295, %v294
        %v297 = vmul.f32 %v296, %v295
        %v298 = vmul.f32 0.5, %v297
        %v299 = vsub.f32 1.5, %v298
        %v300 = vmul.f32 %v295, %v299
        %vm301 = vweird.f32 %v294
        %vm302 = vweird.f32 %v295
        %vm303 = vmor %vm301, %vm302
        %v304 = vsel %vm303, %v295, %v300
        %v305 = vmul.f32 %v288, %v304
        %v306 = vld [vmem:[%s1] sm:$0x1]
        %v308 = vperm.slane %v306, 0
        %v310 = vmul.f32 %v305, %v308
        %v311 = vld [vmem:[%s2] sm:$0x1]
        %v313 = vperm.slane %v311, 0
        %v315 = vadd.f32 %v310, %v313
        %v316 = vpack.c.bf16 %v315, %v315
        %v317 = vld [vmem:[%s3] sm:$0xf]
        %v318 = vld [vmem:[%s3 + $0x4] sm:$0xf]
        %v319 = vld [vmem:[%s3 + $0x8] sm:$0xf]
        %v320 = vld [vmem:[%s3 + $0xc] sm:$0xf]
        %v321 = vld [vmem:[%s4] sm:$0x1]
        %v323 = vperm.slane %v321, 0
        %v329 = vunpack.c.l.b16 %v317
        %v330 = vunpack.c.l.b16 %v318
        %v331 = vunpack.c.l.b16 %v319
        %v332 = vunpack.c.l.b16 %v320
        %v333 = vpack.c.b16 %v330, %v329
        %v334 = vpack.c.b16 %v332, %v331
        %v338 = vsel %vm276, %v316, 0
        %340 = vmatpush.bf16.msra.mxu0 0
        %341 = vmatpush.bf16.msra.mxu0 0
        %342 = vmatpush.bf16.msra.mxu0 0
        %343 = vmatpush.bf16.msra.mxu0 0
        %344 = vmatpush.bf16.msra.mxu0 0
        %345 = vmatpush.bf16.msra.mxu0 0
        %346 = vmatpush.bf16.msra.mxu0 %v334
        %347 = vmatpush.bf16.msra.mxu0 %v333
        %348 = vmatmul.bf16.gmra.mxu0 %v338
        %v349 = vpop.f32.mrf.mxu0
        %v350 = vadd.f32 %v323, %v349
        %v351 = vpop.f32.mrf.mxu0
        %352 = vdwg.mxu0
        %v353 = vmax.f32 %v350, 0.0
        %v354 = vpack.c.bf16 %v353, %v353
        %v355 = vld [vmem:[%s5] sm:$0xf]
        %v356 = vld [vmem:[%s5 + $0x4] sm:$0xf]
        %v357 = vld [vmem:[%s5 + $0x8] sm:$0xf]
        %v358 = vld [vmem:[%s5 + $0xc] sm:$0xf]
        %v359 = vld [vmem:[%s5 + $0x10] sm:$0xf]
        %v360 = vld [vmem:[%s5 + $0x14] sm:$0xf]
        %v361 = vld [vmem:[%s5 + $0x18] sm:$0xf]
        %v362 = vld [vmem:[%s5 + $0x1c] sm:$0xf]
        %v363 = vld [vmem:[%s5 + $0x20] sm:$0xf]
        %v364 = vld [vmem:[%s5 + $0x24] sm:$0xf]
        %v365 = vld [vmem:[%s5 + $0x28] sm:$0xf]
        %v366 = vld [vmem:[%s5 + $0x2c] sm:$0xf]
        %v367 = vld [vmem:[%s5 + $0x30] sm:$0xf]
        %v368 = vld [vmem:[%s5 + $0x34] sm:$0xf]
        %v369 = vld [vmem:[%s5 + $0x38] sm:$0xf]
        %v370 = vld [vmem:[%s5 + $0x3c] sm:$0xf]
        %v371 = vld [vmem:[%s6] sm:$0x1]
        %v373 = vperm.slane %v371, 0
        %v391 = vunpack.c.l.b16 %v355
        %v392 = vunpack.c.l.b16 %v356
        %v393 = vunpack.c.l.b16 %v357
        %v394 = vunpack.c.l.b16 %v358
        %v395 = vunpack.c.l.b16 %v359
        %v396 = vunpack.c.l.b16 %v360
        %v397 = vunpack.c.l.b16 %v361
        %v398 = vunpack.c.l.b16 %v362
        %v399 = vunpack.c.l.b16 %v363
        %v400 = vunpack.c.l.b16 %v364
        %v401 = vunpack.c.l.b16 %v365
        %v402 = vunpack.c.l.b16 %v366
        %v403 = vunpack.c.l.b16 %v367
        %v404 = vunpack.c.l.b16 %v368
        %v405 = vunpack.c.l.b16 %v369
        %v406 = vunpack.c.l.b16 %v370
        %v407 = vpack.c.b16 %v392, %v391
        %v408 = vpack.c.b16 %v394, %v393
        %v409 = vpack.c.b16 %v396, %v395
        %v410 = vpack.c.b16 %v398, %v397
        %v411 = vpack.c.b16 %v400, %v399
        %v412 = vpack.c.b16 %v402, %v401
        %v413 = vpack.c.b16 %v404, %v403
        %v414 = vpack.c.b16 %v406, %v405
        %423 = vmatpush.bf16.msra.mxu0 %v414
        %424 = vmatpush.bf16.msra.mxu0 %v413
        %425 = vmatpush.bf16.msra.mxu0 %v412
        %426 = vmatpush.bf16.msra.mxu0 %v411
        %427 = vmatpush.bf16.msra.mxu0 %v410
        %428 = vmatpush.bf16.msra.mxu0 %v409
        %429 = vmatpush.bf16.msra.mxu0 %v408
        %430 = vmatpush.bf16.msra.mxu0 %v407
        %431 = vmatmul.bf16.gmra.mxu0 %v354
        %v432 = vpop.f32.mrf.mxu0
        %v433 = vadd.f32 %v373, %v432
        %v434 = vpop.f32.mrf.mxu0
        %435 = vdwg.mxu0
        %v436 = vadd.f32 %v433, %v275
        %437 = vst.msk [vmem:[%s269] sm:$0xff] %vm276, %v436
        %s438 = sand.u32 %s181, 1
        %s439 = scalar_lea.sflag [#allocation3], %s438
        %s440 = sand.u32 %s181, 1
        %s441 = smul.addr %s440, 8
        %s442 = scalar_lea.vmem [#allocation2], %s441
        // Predicated region
        $region49: #{tpu_custom_call.1} parent=47 // pred_check
          %p443 = pneg %p191
        $region50: #{tpu_custom_call.1} parent=47 // pred_check_branch
          %445 = sbr.rel (%p443) target = $region52
        $region51: #{tpu_custom_call.1} parent=47 // pred_region
          %447 = vsyncadd %s439, 0
          %s448 = smul.addr %s21, 8
          %s449 = scalar_lea.hbm %s7, %s448
          %s451 = sshll.u32 %s442, 4
          %s452 = int_to_ptr.vmem [resolvable:$true] %s451
          %s453 = sshll.u32 %s449, 4
          %s454 = int_to_ptr.hbm [resolvable:$true] %s453
          %456 = dma.vmem_to_hbm [thread:$0]  %s452, 128, %s454, %s439
        $region52: #{tpu_custom_call.1} parent=47 // pred_fallthru
          _
      $region48: #{tpu_custom_call.1} parent=5 // pred_fallthru
        _
      %p457 = scmp.le.s32.totalorder 2, %s16
      // Predicated region
      $region53: #{tpu_custom_call.1} parent=5 // pred_check
        %p458 = pneg %p457
      $region54: #{tpu_custom_call.1} parent=5 // pred_check_branch
        %460 = sbr.rel (%p458) target = $region56
      $region55: #{tpu_custom_call.1} parent=5 // pred_region
        %s461 = ssub.s32 %s16, 2
        // Predicated region
        $region57: #{tpu_custom_call.1} parent=55 // pred_check
          %p462 = pneg %p197
        $region58: #{tpu_custom_call.1} parent=55 // pred_check_branch
          %464 = sbr.rel (%p462) target = $region60
        $region59: #{tpu_custom_call.1} parent=55 // pred_region
          %s465 = sand.u32 %s182, 1
          %s466 = scalar_lea.sflag [#allocation3], %s465
          %s467 = sand.u32 %s182, 1
          %s468 = smul.addr %s467, 8
          %s469 = scalar_lea.vmem [#allocation2], %s468
          %471 = dma.done %s466, 128
        $region60: #{tpu_custom_call.1} parent=55 // pred_fallthru
          _
      $region56: #{tpu_custom_call.1} parent=5 // pred_fallthru
        _
    $region6: #{tpu_custom_call.1} parent=1 // loop_footer
      %s20 = sadd.s32 1, %s16
    $region7: #{tpu_custom_call.1} parent=1 // loop_footer_branch
      %15 = sbr.rel target = $region3
    $region8: #{tpu_custom_call.1} parent=1 // loop_exit
      _
    %472 = vsyncpa [#allocation3], 1
    %s473 = scalar_lea.sflag [#allocation3], 1
    %474 = vsyncpa %s473, 1

</llo_original>
